<compile_context>
chip_gen: v6e
topology: v6e:2x2x1
jax: 0.10.0
libtpu: 0.0.40
codegen_flags: <defaults>
</compile_context>

<pallas_src>
import numpy as np
import jax
import jax.numpy as jnp
from jax.experimental import pallas as pl
from jax.experimental.pallas import tpu as pltpu


def _fixed_knots(num_pieces=100, start_point=1):
    # torch.arange(start_point, 100 - start_point + 1, 100 / num_pieces) / 100
    step = 100.0 / num_pieces
    kn = np.arange(start_point, 100 - start_point + 1, step, dtype=np.float32)
    return (kn / np.float32(100.0)).astype(np.float32)      # (99,) for defaults


# -----------------------------------------------------------------------------
# Kernel: one batch tile (TB, D) -> (TB, Q).  Pure matmul + softplus + matmul.
# -----------------------------------------------------------------------------
def _pwl_kernel(x_ref, wt_ref, b_ref, c_ref, out_ref):
    # knots_map(x): (TB, D) @ (D, Kp) + bias   (MXU)
    z = jnp.dot(x_ref[...], wt_ref[...], preferred_element_type=jnp.float32)
    z = z + b_ref[...]
    # branch-free numerically stable softplus (EUP exp/log overlap the MXU).
    # Matches torch's thresholded softplus to < 2e-9 for z > 20.
    s = jnp.maximum(z, 0.0) + jnp.log1p(jnp.exp(-jnp.abs(z)))
    # fused cumsum + gather/lerp + exp tails + flag blend: one skinny matmul
    # with the precomputed (Kp, Q) coefficient matrix.  Padded columns of z
    # (k >= K) give softplus(0) = log 2, but the padded rows of C are zero so
    # they never contribute.
    out_ref[...] = jnp.dot(s, c_ref[...],
                           preferred_element_type=jnp.float32).astype(out_ref.dtype)
    # NOTE: rows of a ragged last batch tile may contain stale VMEM data; their
    # outputs are discarded by Pallas, and no cross-row contamination is
    # possible (the contraction is over knots, not rows).


# -----------------------------------------------------------------------------
# Wrapper-side precompute: the (Kp, Q) fused coefficient matrix C such that
#   out[b, :] = softplus(knots_map(x))[b, :] @ C
# -----------------------------------------------------------------------------
def _coefficient_matrix(input_q, fk, Kp):
    iq = input_q.reshape(-1).astype(jnp.float32)              # (Q,)
    Q = iq.shape[0]
    K = int(fk.shape[0])
    fk_j = jnp.asarray(fk)
    eps = np.float32(1e-4)
    c_right = np.float32(np.log((1.0 - fk[-2] + eps) / (1.0 - fk[-1] + eps) + eps))
    c_left = np.float32(np.log((fk[2] + eps) / (fk[1] + eps) + eps))

    # center branch: searchsorted + lerp coefficients (same searchsorted as the
    # reference, so knot-boundary quantiles agree exactly).
    ridx = jnp.searchsorted(fk_j, iq, side="right")
    ridx = jnp.minimum(ridx, K - 1)
    lidx = jnp.maximum(ridx - 1, 0)
    ratio = (iq - fk_j[lidx]) / (fk_j[ridx] - fk_j[lidx] + 0.001)

    k_iota = jnp.arange(K, dtype=jnp.int32)[:, None]          # (K, 1)
    w_center = ((k_iota == lidx[None, :]) * (1.0 - ratio)[None, :]
                + (k_iota == ridx[None, :]) * ratio[None, :])

    # exponential tails, folded algebraically:
    #   right_cal = c_r*q_out[:,K-2] + (1-c_r)*q_out[:,K-1]
    #   left_cal  = c_l*q_out[:,1]   + (1-c_l)*q_out[:,0]
    c_r = (jnp.log(1.0 - iq) - np.float32(np.log(1.0 - fk[-1]))) / c_right
    c_l = (jnp.log(iq) - np.float32(np.log(fk[0]))) / c_left
    w_right = ((k_iota == (K - 2)) * c_r[None, :]
               + (k_iota == (K - 1)) * (1.0 - c_r)[None, :])
    w_left = ((k_iota == 1) * c_l[None, :]
              + (k_iota == 0) * (1.0 - c_l)[None, :])

    left_flag = iq < fk[0]
    right_flag = iq > fk[-1]
    w = jnp.where(right_flag[None, :], w_right,
                  jnp.where(left_flag[None, :], w_left, w_center))   # (K, Q)

    # Fold the cumsum in: out = q_out @ w = (s @ tri) @ w = s @ (tri @ w);
    # tri @ w is simply a reverse cumsum of w along the knot axis.
    c = jnp.cumsum(w[::-1, :], axis=0)[::-1, :]                      # (K, Q)
    return jnp.zeros((Kp, Q), jnp.float32).at[:K, :].set(c.astype(jnp.float32))


# -----------------------------------------------------------------------------
# Per-generation tile / scoped-VMEM selection.
# -----------------------------------------------------------------------------
def _round_up(n, m):
    return ((n + m - 1) // m) * m


def _select_tile(B, D, Kp, Q, block_b=None):
    kind = ""
    try:
        kind = jax.devices()[0].device_kind.lower()
    except Exception:
        pass
    vmem_cap = None
    try:
        vmem_cap = int(pltpu.get_tpu_info().vmem_capacity_bytes)
    except Exception:
        pass

    is_v7 = ("v7" in kind) or ("tpu7" in kind) or \
            (vmem_cap is not None and vmem_cap <= (64 << 20))
    is_v5e = ("v5 lite" in kind) or ("v5e" in kind) or ("v5lite" in kind)

    if is_v7:
        # 64 MiB physical VMEM, 2 TensorCores: moderate tiles and >= 2 grid
        # steps so dimension_semantics=("parallel",) can shard across cores.
        budget, max_tb, min_steps, default_scoped = 24 << 20, 2048, 2, 32 << 20
    elif is_v5e:
        # 128 MiB VMEM but only 16 MiB default scoped; slower f32 MXU.
        budget, max_tb, min_steps, default_scoped = 14 << 20, 512, 1, 16 << 20
    else:
        # v6e / unknown: 128 MiB VMEM, single TensorCore -> push tiles hard.
        budget, max_tb, min_steps, default_scoped = 56 << 20, 4096, 1, 32 << 20

    def working_set(tb):
        return 4 * (2 * tb * D              # double-buffered x tile
                    + 3 * tb * Kp           # z / softplus / matmul intermediates
                    + 2 * tb * Q            # double-buffered out tile
                    + D * Kp + Kp + Kp * Q)  # resident weight / bias / C

    if block_b is not None:
        tb = min(int(block_b), B)
        if tb < B:
            tb = _round_up(max(tb, 8), 8)
    else:
        tb = max_tb
        while tb > 128 and working_set(tb) > budget:
            tb //= 2
        if B <= tb:
            if min_steps > 1 and B >= 256:
                tb = _round_up(pl.cdiv(B, min_steps), 8)
            else:
                tb = B

    vmem_limit = None
    need = working_set(min(tb, B))
    if need > (default_scoped * 3) // 4:
        vmem_limit = int(min(2 * need, budget + (8 << 20)))
    return tb, vmem_limit


# -----------------------------------------------------------------------------
# Public forward.
# -----------------------------------------------------------------------------
def dynamic_range_exp_pwl(x, input_q, weight, bias, *,
                          num_pieces=100, start_point=1, block_b=None):
    """Forward pass of DynamicRangeExpPWL.

    x:        (B, D) float32
    input_q:  (Q,) or (1, Q) shared quantile levels in (0, 1)
    weight:   (K, D) knots_map weight (K == len(fixed_knots))
    bias:     (K,)   knots_map bias
    returns:  (B, Q) float32
    """
    x = jnp.asarray(x, jnp.float32)
    B, D = x.shape
    weight = jnp.asarray(weight, jnp.float32)
    bias = jnp.asarray(bias, jnp.float32)
    K = weight.shape[0]

    fk = _fixed_knots(num_pieces, start_point)
    assert fk.shape[0] == K, (fk.shape, K)

    input_q = jnp.asarray(input_q, jnp.float32)
    if input_q.ndim == 1:
        input_q = input_q[None, :]
    if input_q.shape[0] != 1:
        # TODO(synk): per-row quantile levels would need an in-kernel coefficient
        # build (or per-row gather); the fused kernel assumes shared quantiles.
        raise NotImplementedError("input_q must be (Q,) or (1, Q) shared quantiles")
    Q = input_q.shape[1]

    # ---- lane-align K -> Kp (multiple of 128); zero-pad extra columns -------
    Kp = ((K + 127) // 128) * 128
    wt = jnp.zeros((D, Kp), jnp.float32).at[:, :K].set(weight.T)
    b2 = jnp.zeros((1, Kp), jnp.float32).at[:, :K].set(bias[None, :])

    # ---- precompute the fused (Kp, Q) coefficient matrix (grid-invariant) ---
    coef = _coefficient_matrix(input_q, fk, Kp)

    # ---- per-generation batch tile and scoped-VMEM override -----------------
    TB, vmem_limit = _select_tile(B, D, Kp, Q, block_b)
    grid = (pl.cdiv(B, TB),)

    cp_kwargs = dict(dimension_semantics=("parallel",))
    if vmem_limit is not None:
        cp_kwargs["vmem_limit_bytes"] = vmem_limit

    return pl.pallas_call(
        _pwl_kernel,
        out_shape=jax.ShapeDtypeStruct((B, Q), jnp.float32),
        grid=grid,
        in_specs=[
            pl.BlockSpec((TB, D), lambda i: (i, 0)),     # x: streamed per tile
            pl.BlockSpec((D, Kp), lambda i: (0, 0)),     # weight: VMEM-resident
            pl.BlockSpec((1, Kp), lambda i: (0, 0)),     # bias: resident
            pl.BlockSpec((Kp, Q), lambda i: (0, 0)),     # fused coefficients: resident
        ],
        # (TB, Q) output: store traffic (~Q=8 lanes) is negligible next to the
        # x stream and the two matmuls, so no transposed lane-dense layout.
        out_specs=pl.BlockSpec((TB, Q), lambda i: (i, 0)),
        compiler_params=pltpu.CompilerParams(**cp_kwargs),
    )(x, wt, b2, coef)


# -----------------------------------------------------------------------------
# Pure-JAX reference (literal port of the PyTorch forward) for validation.
# -----------------------------------------------------------------------------
def _reference_forward(x, input_q, weight, bias, fk):
    eps = np.float32(1e-4)
    z = jnp.dot(x, weight.T, precision=jax.lax.Precision.HIGHEST) + bias[None, :]
    q_out = jnp.cumsum(jax.nn.softplus(z), axis=1)
    B = x.shape[0]
    K = fk.shape[0]
    iq = jnp.broadcast_to(input_q, (B, input_q.shape[-1]))

    c_right = jnp.log((1.0 - fk[-2] + eps) / (1.0 - fk[-1] + eps) + eps)
    beta_right = c_right / (q_out[:, -2:-1] - q_out[:, -1:])
    c_left = jnp.log((fk[2] + eps) / (fk[1] + eps) + eps)
    beta_left = c_left / (q_out[:, 1:2] - q_out[:, :1])

    right_a = 1.0 / beta_right
    right_b = -right_a * jnp.log(1.0 - fk[-1]) + q_out[:, -1:]
    right_cal = jnp.log(1.0 - iq) * right_a + right_b
    left_a = 1.0 / beta_left
    left_b = -left_a * jnp.log(fk[0]) + q_out[:, :1]
    left_cal = jnp.log(iq) * left_a + left_b

    left_flag = iq < fk[0]
    right_flag = iq > fk[-1]
    center_flag = jnp.logical_and(~left_flag, ~right_flag)

    ridx = jnp.searchsorted(fk, input_q.reshape(-1), side="right")
    ridx = jnp.where(ridx >= K, K - 1, ridx)
    lidx = jnp.where(ridx - 1 >= 0, ridx - 1, 0)
    y_left = q_out[:, lidx]
    y_right = q_out[:, ridx]
    q_l = fk[lidx][None, :]
    q_r = fk[ridx][None, :]
    ratio = (iq - q_l) / (q_r - q_l + 0.001)
    center_cal = y_left + ratio * (y_right - y_left)
    return (center_cal * center_flag
            + left_flag * left_cal
            + right_flag * right_cal)


if __name__ == "__main__":
    root = jax.random.PRNGKey(0)
    key_small, key_big = jax.random.split(root)
    fk = _fixed_knots()
    K = fk.shape[0]                     # 99
    fk_j = jnp.asarray(fk)

    def make_inputs(key, B, D, Q):
        k_x, k_q, k_w, k_b = jax.random.split(key, 4)
        x = jax.random.normal(k_x, (B, D), dtype=jnp.float32)
        input_q = jax.random.uniform(k_q, (1, Q), dtype=jnp.float32,
                                     minval=0.001, maxval=0.999)
        bound = 1.0 / float(np.sqrt(D))
        weight = jax.random.uniform(k_w, (K, D), dtype=jnp.float32,
                                    minval=-bound, maxval=bound)
        bias = jax.random.uniform(k_b, (K,), dtype=jnp.float32,
                                  minval=-bound, maxval=bound)
        return x, input_q, weight, bias

    # ---- small canonical shapes (single tile, auto tile selection) ----------
    B, D, Q = 2, 32, 8
    x, input_q, weight, bias = make_inputs(key_small, B, D, Q)
    out = jax.block_until_ready(dynamic_range_exp_pwl(x, input_q, weight, bias))
    assert out.shape == (B, Q), out.shape
    assert bool(jnp.all(jnp.isfinite(out)))
    ref = jax.block_until_ready(_reference_forward(x, input_q, weight, bias, fk_j))
    np.testing.assert_allclose(np.asarray(out), np.asarray(ref),
                               rtol=5e-3, atol=5e-3)

    # ---- also include boundary quantiles (tails + exact-knot center) --------
    edge_q = jnp.asarray([[0.001, 0.005, 0.01, 0.5, 0.55, 0.99, 0.995, 0.999]],
                         dtype=jnp.float32)
    out_e = jax.block_until_ready(dynamic_range_exp_pwl(x, edge_q, weight, bias))
    ref_e = jax.block_until_ready(_reference_forward(x, edge_q, weight, bias, fk_j))
    np.testing.assert_allclose(np.asarray(out_e), np.asarray(ref_e),
                               rtol=5e-3, atol=5e-3)

    # ---- multi-tile grid with a ragged last block (exercises the pipeline) --
    B2 = 300
    x2, input_q2, weight2, bias2 = make_inputs(key_big, B2, D, Q)
    out2 = jax.block_until_ready(
        dynamic_range_exp_pwl(x2, input_q2, weight2, bias2, block_b=128))
    assert out2.shape == (B2, Q), out2.shape
    assert bool(jnp.all(jnp.isfinite(out2)))
    ref2 = jax.block_until_ready(
        _reference_forward(x2, input_q2, weight2, bias2, fk_j))
    np.testing.assert_allclose(np.asarray(out2), np.asarray(ref2),
                               rtol=5e-3, atol=5e-3)

    print("KERNEL_OK")
</pallas_src>

<mosaic_0001>
module attributes {stable_mosaic.version = 11 : i64} {
  func.func @_pwl_kernel(%arg0: i32, %arg1: memref<2x32xf32, #tpu.memory_space<vmem>>, %arg2: memref<32x128xf32, #tpu.memory_space<vmem>>, %arg3: memref<1x128xf32, #tpu.memory_space<vmem>>, %arg4: memref<128x8xf32, #tpu.memory_space<vmem>>, %arg5: memref<2x8xf32, #tpu.memory_space<vmem>>) attributes {dimension_semantics = [#tpu.dimension_semantics<parallel>], iteration_bounds = array<i64: 1>, scalar_prefetch = 0 : i64, scratch_operands = 0 : i64, tpu.core_type = #tpu.core_type<tc>, window_params = [{transform_indices = @transform_0, window_bounds = array<i64: 2, 32>}, {pipeline_mode = #tpu.pipeline_mode<synchronous>, transform_indices = @transform_1, window_bounds = array<i64: 32, 128>}, {pipeline_mode = #tpu.pipeline_mode<synchronous>, transform_indices = @transform_2, window_bounds = array<i64: 1, 128>}, {pipeline_mode = #tpu.pipeline_mode<synchronous>, transform_indices = @transform_3, window_bounds = array<i64: 128, 8>}, {transform_indices = @transform_4, window_bounds = array<i64: 2, 8>}]} {
    %c0 = arith.constant 0 : index
    %c0_0 = arith.constant 0 : index
    %0 = vector.load %arg1[%c0, %c0_0] : memref<2x32xf32, #tpu.memory_space<vmem>>, vector<2x32xf32>
    %c0_1 = arith.constant 0 : index
    %c0_2 = arith.constant 0 : index
    %1 = vector.load %arg2[%c0_1, %c0_2] : memref<32x128xf32, #tpu.memory_space<vmem>>, vector<32x128xf32>
    %cst = arith.constant dense<0.000000e+00> : vector<2x128xf32>
    %2 = tpu.matmul %0, %1, %cst {dimension_numbers = #tpu.dot_dimension_numbers<[1], [0], [0], [1], [0, 0, 1, 1], [], []>} : vector<2x32xf32>, vector<32x128xf32>, vector<2x128xf32> -> vector<2x128xf32>
    %c0_3 = arith.constant 0 : index
    %c0_4 = arith.constant 0 : index
    %3 = vector.load %arg3[%c0_3, %c0_4] : memref<1x128xf32, #tpu.memory_space<vmem>>, vector<1x128xf32>
    %4 = vector.broadcast %3 : vector<1x128xf32> to vector<2x128xf32>
    %5 = arith.addf %2, %4 : vector<2x128xf32>
    %cst_5 = arith.constant 0.000000e+00 : f32
    %6 = vector.broadcast %cst_5 : f32 to vector<2x128xf32>
    %7 = arith.maximumf %5, %6 : vector<2x128xf32>
    %8 = math.absf %5 : vector<2x128xf32>
    %cst_6 = arith.constant 0.000000e+00 : f32
    %9 = vector.broadcast %cst_6 : f32 to vector<2x128xf32>
    %10 = arith.subf %9, %8 : vector<2x128xf32>
    %11 = math.exp %10 : vector<2x128xf32>
    %12 = math.log1p %11 : vector<2x128xf32>
    %13 = arith.addf %7, %12 : vector<2x128xf32>
    %c0_7 = arith.constant 0 : index
    %c0_8 = arith.constant 0 : index
    %14 = vector.load %arg4[%c0_7, %c0_8] : memref<128x8xf32, #tpu.memory_space<vmem>>, vector<128x8xf32>
    %cst_9 = arith.constant dense<0.000000e+00> : vector<2x8xf32>
    %15 = tpu.matmul %13, %14, %cst_9 {dimension_numbers = #tpu.dot_dimension_numbers<[1], [0], [0], [1], [0, 0, 1, 1], [], []>} : vector<2x128xf32>, vector<128x8xf32>, vector<2x8xf32> -> vector<2x8xf32>
    %c0_10 = arith.constant 0 : index
    %c0_11 = arith.constant 0 : index
    %16 = vector.load %arg5[%c0_10, %c0_11] : memref<2x8xf32, #tpu.memory_space<vmem>>, vector<2x8xf32>
    tpu.vector_store %arg5[%c0_10, %c0_11], %15 {strides = array<i32>} : memref<2x8xf32, #tpu.memory_space<vmem>>, vector<2x8xf32>,
    return
  }
  func.func @transform_0(%arg0: i32) -> (i32, i32) {
    %c0_i32 = arith.constant 0 : i32
    %c0_i32_0 = arith.constant 0 : i32
    return %arg0, %c0_i32 : i32, i32
  }
  func.func @transform_1(%arg0: i32) -> (i32, i32) {
    %c0_i32 = arith.constant 0 : i32
    %c0_i32_0 = arith.constant 0 : i32
    %c0_i32_1 = arith.constant 0 : i32
    return %c0_i32, %c0_i32_0 : i32, i32
  }
  func.func @transform_2(%arg0: i32) -> (i32, i32) {
    %c0_i32 = arith.constant 0 : i32
    %c0_i32_0 = arith.constant 0 : i32
    %c0_i32_1 = arith.constant 0 : i32
    return %c0_i32, %c0_i32_0 : i32, i32
  }
  func.func @transform_3(%arg0: i32) -> (i32, i32) {
    %c0_i32 = arith.constant 0 : i32
    %c0_i32_0 = arith.constant 0 : i32
    %c0_i32_1 = arith.constant 0 : i32
    return %c0_i32, %c0_i32_0 : i32, i32
  }
  func.func @transform_4(%arg0: i32) -> (i32, i32) {
    %c0_i32 = arith.constant 0 : i32
    %c0_i32_0 = arith.constant 0 : i32
    return %arg0, %c0_i32 : i32, i32
  }
}

</mosaic_0001>

<llo_original>
// kernel: tpu_custom_call.1
$region0: #{tpu_custom_call.1}
  #allocation0 [shape = 'u32[]', space=smem, size = 0x4, offset = 0x4, fixed_abs, tag = 'smem constant byte address 0x4 - core index']
  #allocation1 [shape = 'u32[144,128]{1,0:T(1,128)}', space=vmem, size = 0x12000, scoped, tag = 'internal scratch']
  %s0 = inlined_call_operand.vmem [shape: f32[2,32], index: 0, kind: input, shape index: {}]
  %s1 = inlined_call_operand.vmem [shape: f32[32,128], index: 1, kind: input, shape index: {}]
  %s2 = inlined_call_operand.vmem [shape: f32[1,128], index: 2, kind: input, shape index: {}]
  %s3 = inlined_call_operand.vmem [shape: f32[128,8], index: 3, kind: input, shape index: {}]
  %s4 = inlined_call_operand.hbm [shape: f32[2,8], index: 4, kind: output, shape index: {}]
  %s5 = sld [smem:[#allocation0]]
  $region26: #{tpu_custom_call.1} parent=0
    _
  %s7 = ssub.s32 1, %s5
  %s8 = scalar_select 0, %s7, %s5
  $region1: #{tpu_custom_call.1} parent=0
    #allocation2 [shape = 'u8[1024]{0}', space=vmem, size = 0x400, scoped, tag = 'output window, operand 0, single buffered']
    #allocation3 [shape = 's32[1]{0}', space=sflag, size = 0x4, scoped, tag = 'scoped memory for tpu_custom_call.1']
    %9 = vsyncpa [#allocation3], 0
    // Predicated region
    $region2: #{tpu_custom_call.1} parent=1 // pred_check
      _
    $region3: #{tpu_custom_call.1} parent=1 // pred_check_branch
      %11 = sbr.rel (0) target = $region5
    $region4: #{tpu_custom_call.1} parent=1 // pred_region
      _
    $region5: #{tpu_custom_call.1} parent=1 // pred_fallthru
      _
    // Predicated region
    $region6: #{tpu_custom_call.1} parent=1 // pred_check
      _
    $region7: #{tpu_custom_call.1} parent=1 // pred_check_branch
      %13 = sbr.rel (0) target = $region9
    $region8: #{tpu_custom_call.1} parent=1 // pred_region
      _
    $region9: #{tpu_custom_call.1} parent=1 // pred_fallthru
      _
    // Predicated region
    $region10: #{tpu_custom_call.1} parent=1 // pred_check
      _
    $region11: #{tpu_custom_call.1} parent=1 // pred_check_branch
      %15 = sbr.rel (0) target = $region13
    $region12: #{tpu_custom_call.1} parent=1 // pred_region
      _
    $region13: #{tpu_custom_call.1} parent=1 // pred_fallthru
      _
    // Predicated region
    $region14: #{tpu_custom_call.1} parent=1 // pred_check
      _
    $region15: #{tpu_custom_call.1} parent=1 // pred_check_branch
      %17 = sbr.rel (0) target = $region17
    $region16: #{tpu_custom_call.1} parent=1 // pred_region
      _
    $region17: #{tpu_custom_call.1} parent=1 // pred_fallthru
      _
    %v18 = vld [vmem:[%s0] sm:$0x3]
    %v19 = vld [vmem:[%s1] sm:$0xff]
    %v20 = vld [vmem:[%s1 + $0x8] sm:$0xff]
    %v21 = vld [vmem:[%s1 + $0x10] sm:$0xff]
    %v22 = vld [vmem:[%s1 + $0x18] sm:$0xff]
    %v23 = vld [vmem:[%s2] sm:$0x1]
    %v25 = vlaneseq
    %v26 = vshrl.u32 %v25, 7
    %v27 = vsub.s32 0, %v26
    %v28 = vrot.slane %v23, %v27
    %vm30 = vcmask 261120
    %v32 = vsel %vm30, %v18, 0
    %34 = vmatprep.subr.mxu0 0.0
    %35 = vmatpush1.msra.mxu0 0.0
    %36 = vmatprep.subr.mxu0 0.0
    %37 = vmatpush1.msra.mxu0 0.0
    %38 = vmatprep.subr.mxu0 0.0
    %39 = vmatpush1.msra.mxu0 0.0
    %40 = vmatprep.subr.mxu0 0.0
    %41 = vmatpush1.msra.mxu0 0.0
    %42 = vmatprep.subr.mxu0 0.0
    %43 = vmatpush1.msra.mxu0 0.0
    %44 = vmatprep.subr.mxu0 0.0
    %45 = vmatpush1.msra.mxu0 0.0
    %46 = vmatprep.subr.mxu0 0.0
    %47 = vmatpush1.msra.mxu0 0.0
    %48 = vmatprep.subr.mxu0 0.0
    %49 = vmatpush1.msra.mxu0 0.0
    %50 = vmatprep.subr.mxu0 0.0
    %51 = vmatpush1.msra.mxu0 0.0
    %52 = vmatprep.subr.mxu0 0.0
    %53 = vmatpush1.msra.mxu0 0.0
    %54 = vmatprep.subr.mxu0 0.0
    %55 = vmatpush1.msra.mxu0 0.0
    %56 = vmatprep.subr.mxu0 0.0
    %57 = vmatpush1.msra.mxu0 0.0
    %58 = vmatprep.subr.mxu0 0.0
    %59 = vmatpush1.msra.mxu0 %v22
    %60 = vmatprep.subr.mxu0 0.0
    %61 = vmatpush1.msra.mxu0 %v21
    %62 = vmatprep.subr.mxu0 0.0
    %63 = vmatpush1.msra.mxu0 %v20
    %64 = vmatprep.subr.mxu0 0.0
    %65 = vmatpush1.msra.mxu0 %v19
    %66 = vmatprep.subr.mxu0 0.0
    %67 = vmatpush2.msra.mxu0 0.0
    %68 = vmatprep.subr.mxu0 0.0
    %69 = vmatpush2.msra.mxu0 0.0
    %70 = vmatprep.subr.mxu0 0.0
    %71 = vmatpush2.msra.mxu0 0.0
    %72 = vmatprep.subr.mxu0 0.0
    %73 = vmatpush2.msra.mxu0 0.0
    %74 = vmatprep.subr.mxu0 0.0
    %75 = vmatpush2.msra.mxu0 0.0
    %76 = vmatprep.subr.mxu0 0.0
    %77 = vmatpush2.msra.mxu0 0.0
    %78 = vmatprep.subr.mxu0 0.0
    %79 = vmatpush2.msra.mxu0 0.0
    %80 = vmatprep.subr.mxu0 0.0
    %81 = vmatpush2.msra.mxu0 0.0
    %82 = vmatprep.subr.mxu0 0.0
    %83 = vmatpush2.msra.mxu0 0.0
    %84 = vmatprep.subr.mxu0 0.0
    %85 = vmatpush2.msra.mxu0 0.0
    %86 = vmatprep.subr.mxu0 0.0
    %87 = vmatpush2.msra.mxu0 0.0
    %88 = vmatprep.subr.mxu0 0.0
    %89 = vmatpush2.msra.mxu0 0.0
    %90 = vmatprep.subr.mxu0 0.0
    %91 = vmatpush2.msra.mxu0 0.0
    %92 = vmatprep.subr.mxu0 0.0
    %93 = vmatpush2.msra.mxu0 0.0
    %94 = vmatprep.subr.mxu0 0.0
    %95 = vmatpush2.msra.mxu0 0.0
    %96 = vmatprep.subr.mxu0 0.0
    %97 = vmatpush2.msra.mxu0 0.0
    %98 = vmatprep.mubr.f32.mxu0 0.0
    %99 = vmatmul.mubr.f32.gmra.mxu0 %v32
    %v100 = vpop.f32.mrf.mxu0
    %v101 = vadd.f32 %v28, %v100
    %v102 = vpop.f32.mrf.mxu0
    %103 = vdwg.mxu0
    %v104 = vmax.f32 %v101, 0.0
    %v105 = vand.u32 2147483647, %v101
    %v106 = vsub.f32 0.0, %v105
    %v107 = vmul.f32 %v106, 1.442695
    %v108 = vpow.pop %v107
    %v109 = vadd.f32 %v108, 1.0
    %v110 = vlog2.pop %v109
    %v111 = vmul.f32 %v110, 0.6931472
    %v112 = vmul.f32 -0.5, %v108
    %v113 = vadd.f32 %v112, 1.0
    %v114 = vmul.f32 %v113, %v108
    %v115 = vand.u32 2147483647, %v108
    %vm116 = vcmp.lt.f32.partialorder %v115, 0.0004427343
    %v117 = vsel %vm116, %v114, %v111
    %v118 = vadd.f32 %v104, %v117
    %v119 = vld [vmem:[%s3] sm:$0xff]
    %v120 = vld [vmem:[%s3 + $0x8] sm:$0xff]
    %v121 = vld [vmem:[%s3 + $0x10] sm:$0xff]
    %v122 = vld [vmem:[%s3 + $0x18] sm:$0xff]
    %v123 = vld [vmem:[%s3 + $0x20] sm:$0xff]
    %v124 = vld [vmem:[%s3 + $0x28] sm:$0xff]
    %v125 = vld [vmem:[%s3 + $0x30] sm:$0xff]
    %v126 = vld [vmem:[%s3 + $0x38] sm:$0xff]
    %v127 = vld [vmem:[%s3 + $0x40] sm:$0xff]
    %v128 = vld [vmem:[%s3 + $0x48] sm:$0xff]
    %v129 = vld [vmem:[%s3 + $0x50] sm:$0xff]
    %v130 = vld [vmem:[%s3 + $0x58] sm:$0xff]
    %v131 = vld [vmem:[%s3 + $0x60] sm:$0xff]
    %v132 = vld [vmem:[%s3 + $0x68] sm:$0xff]
    %v133 = vld [vmem:[%s3 + $0x70] sm:$0xff]
    %v134 = vld [vmem:[%s3 + $0x78] sm:$0xff]
    %135 = vmatprep.subr.mxu0 0.0
    %136 = vmatpush1.msra.mxu0 %v134
    %137 = vmatprep.subr.mxu0 0.0
    %138 = vmatpush1.msra.mxu0 %v133
    %139 = vmatprep.subr.mxu0 0.0
    %140 = vmatpush1.msra.mxu0 %v132
    %141 = vmatprep.subr.mxu0 0.0
    %142 = vmatpush1.msra.mxu0 %v131
    %143 = vmatprep.subr.mxu0 0.0
    %144 = vmatpush1.msra.mxu0 %v130
    %145 = vmatprep.subr.mxu0 0.0
    %146 = vmatpush1.msra.mxu0 %v129
    %147 = vmatprep.subr.mxu0 0.0
    %148 = vmatpush1.msra.mxu0 %v128
    %149 = vmatprep.subr.mxu0 0.0
    %150 = vmatpush1.msra.mxu0 %v127
    %151 = vmatprep.subr.mxu0 0.0
    %152 = vmatpush1.msra.mxu0 %v126
    %153 = vmatprep.subr.mxu0 0.0
    %154 = vmatpush1.msra.mxu0 %v125
    %155 = vmatprep.subr.mxu0 0.0
    %156 = vmatpush1.msra.mxu0 %v124
    %157 = vmatprep.subr.mxu0 0.0
    %158 = vmatpush1.msra.mxu0 %v123
    %159 = vmatprep.subr.mxu0 0.0
    %160 = vmatpush1.msra.mxu0 %v122
    %161 = vmatprep.subr.mxu0 0.0
    %162 = vmatpush1.msra.mxu0 %v121
    %163 = vmatprep.subr.mxu0 0.0
    %164 = vmatpush1.msra.mxu0 %v120
    %165 = vmatprep.subr.mxu0 0.0
    %166 = vmatpush1.msra.mxu0 %v119
    %167 = vmatprep.subr.mxu0 0.0
    %168 = vmatpush2.msra.mxu0 0.0
    %169 = vmatprep.subr.mxu0 0.0
    %170 = vmatpush2.msra.mxu0 0.0
    %171 = vmatprep.subr.mxu0 0.0
    %172 = vmatpush2.msra.mxu0 0.0
    %173 = vmatprep.subr.mxu0 0.0
    %174 = vmatpush2.msra.mxu0 0.0
    %175 = vmatprep.subr.mxu0 0.0
    %176 = vmatpush2.msra.mxu0 0.0
    %177 = vmatprep.subr.mxu0 0.0
    %178 = vmatpush2.msra.mxu0 0.0
    %179 = vmatprep.subr.mxu0 0.0
    %180 = vmatpush2.msra.mxu0 0.0
    %181 = vmatprep.subr.mxu0 0.0
    %182 = vmatpush2.msra.mxu0 0.0
    %183 = vmatprep.subr.mxu0 0.0
    %184 = vmatpush2.msra.mxu0 0.0
    %185 = vmatprep.subr.mxu0 0.0
    %186 = vmatpush2.msra.mxu0 0.0
    %187 = vmatprep.subr.mxu0 0.0
    %188 = vmatpush2.msra.mxu0 0.0
    %189 = vmatprep.subr.mxu0 0.0
    %190 = vmatpush2.msra.mxu0 0.0
    %191 = vmatprep.subr.mxu0 0.0
    %192 = vmatpush2.msra.mxu0 0.0
    %193 = vmatprep.subr.mxu0 0.0
    %194 = vmatpush2.msra.mxu0 0.0
    %195 = vmatprep.subr.mxu0 0.0
    %196 = vmatpush2.msra.mxu0 0.0
    %197 = vmatprep.subr.mxu0 0.0
    %198 = vmatpush2.msra.mxu0 0.0
    %199 = vmatprep.mubr.f32.mxu0 0.0
    %200 = vmatmul.mubr.f32.gmra.mxu0 %v118
    %v201 = vpop.f32.mrf.mxu0
    %v202 = vadd.f32 0.0, %v201
    %v203 = vpop.f32.mrf.mxu0
    %204 = vdwg.mxu0
    %vm205 = vcmask 58368
    %206 = vst.msk [vmem:[#allocation2] sm:$0x3] %vm205, %v202
    // Predicated region
    $region18: #{tpu_custom_call.1} parent=1 // pred_check
      _
    $region19: #{tpu_custom_call.1} parent=1 // pred_check_branch
      %208 = sbr.rel (0) target = $region21
    $region20: #{tpu_custom_call.1} parent=1 // pred_region
      %s210 = ssub.s32 32, 32
      %211 = vsyncadd [#allocation3], %s210
      %s213 = sshll.u32 [#allocation2], 4
      %s214 = int_to_ptr.vmem [resolvable:$true] %s213
      %216 = dma.vmem_to_hbm [thread:$0]  %s214, 32, %s4, [#allocation3]
    $region21: #{tpu_custom_call.1} parent=1 // pred_fallthru
      _
    // Predicated region
    $region22: #{tpu_custom_call.1} parent=1 // pred_check
      _
    $region23: #{tpu_custom_call.1} parent=1 // pred_check_branch
      %218 = sbr.rel (0) target = $region25
    $region24: #{tpu_custom_call.1} parent=1 // pred_region
      %219 = dma.done [#allocation3], 32
    $region25: #{tpu_custom_call.1} parent=1 // pred_fallthru
      _
    %220 = vsyncpa [#allocation3], 1

</llo_original>
